<compile_context>
chip_gen: v7x
topology: tpu7x:2x2x1
jax: 0.10.0
libtpu: 0.0.40
codegen_flags: <defaults>
</compile_context>

<pallas_src>
import math
from functools import partial

import jax
import jax.numpy as jnp
from jax import lax
from jax.experimental import pallas as pl
from jax.experimental.pallas import tpu as pltpu


# ---------------------------------------------------------------------------
# Shared helpers
# ---------------------------------------------------------------------------
def _mxu_dot(a, b, dims, use_bf16):
    """MXU matmul with f32 accumulation; optional bf16 operands (~3x MXU throughput)."""
    if use_bf16:
        return lax.dot_general(a.astype(jnp.bfloat16), b.astype(jnp.bfloat16), dims,
                               preferred_element_type=jnp.float32)
    return lax.dot_general(a, b, dims, precision=jax.lax.Precision.HIGHEST,
                           preferred_element_type=jnp.float32)


def _vmem_limit(block_bytes):
    """Scoped-VMEM limit sized from the actual block footprint (double-buffered) with
    headroom, clamped to 64 MiB so it is legal on v5e/v6e/v7x alike."""
    return int(min(max(2 * block_bytes + (8 << 20), 32 << 20), 64 << 20))


def _pick_head_block(embed_dim, head_dim, target=512):
    """Lane-axis (head) tile: a multiple of both head_dim and 128 that divides embed_dim."""
    if embed_dim <= target:
        return embed_dim
    step = head_dim * 128 // math.gcd(head_dim, 128)       # lcm(head_dim, 128)
    hb = (target // step) * step
    if hb <= 0 or embed_dim % hb != 0:
        # TODO(synk): online-softmax src-axis tiling for head dims that do not tile cleanly.
        return embed_dim
    return hb


# ---------------------------------------------------------------------------
# Kernel 1: tiled linear  y = x @ W + b  (W stored pre-transposed as (in, out))
# Grid: (M blocks, N blocks, K blocks); K is an 'arbitrary' reduction axis that
# accumulates into an f32 VMEM scratch (pl.when init / finalize).
# ---------------------------------------------------------------------------
def _linear_kernel(x_ref, w_ref, b_ref, o_ref, acc_ref, *, use_bf16):
    k = pl.program_id(2)

    @pl.when(k == 0)
    def _():
        acc_ref[...] = jnp.zeros_like(acc_ref)

    acc_ref[...] += _mxu_dot(x_ref[...], w_ref[...],
                             (((1,), (0,)), ((), ())), use_bf16)

    @pl.when(k == pl.num_programs(2) - 1)
    def _():
        o_ref[...] = (acc_ref[...] + b_ref[...]).astype(o_ref.dtype)


def pallas_linear(x, w, b, *, block_m=256, block_n=256, block_k=512, use_bf16=False):
    """x: (N, in_dim), w: (in_dim, out_dim)  [pre-transposed], b: (out_dim,) -> (N, out_dim)."""
    n, k_dim = x.shape
    m = w.shape[1]

    bm = n if n <= block_m else block_m          # 256 is a multiple of 8 (M ragged OK)
    bn = m if m <= block_n else block_n          # 256 is a multiple of 128 (N ragged OK)
    # K is the reduction axis: its block must divide K exactly (padded garbage would
    # otherwise pollute the accumulator), so fall back to full K when it does not.
    bk = block_k if (k_dim > block_k and k_dim % block_k == 0) else k_dim

    grid = (pl.cdiv(n, bm), pl.cdiv(m, bn), k_dim // bk)
    block_bytes = 4 * (bm * bk + bk * bn + 2 * bm * bn + bn)

    return pl.pallas_call(
        partial(_linear_kernel, use_bf16=use_bf16),
        grid=grid,
        in_specs=[
            pl.BlockSpec((bm, bk), lambda i, j, k: (i, k)),
            pl.BlockSpec((bk, bn), lambda i, j, k: (k, j)),
            pl.BlockSpec((1, bn), lambda i, j, k: (0, j)),
        ],
        out_specs=pl.BlockSpec((bm, bn), lambda i, j, k: (i, j)),
        out_shape=jax.ShapeDtypeStruct((n, m), jnp.float32),
        scratch_shapes=[pltpu.VMEM((bm, bn), jnp.float32)],
        compiler_params=pltpu.CompilerParams(
            dimension_semantics=("parallel", "parallel", "arbitrary"),
            vmem_limit_bytes=_vmem_limit(block_bytes),
        ),
    )(x, w, b.reshape(1, m))


# ---------------------------------------------------------------------------
# Kernel 2: scaled-dot-product attention.
#   * inputs are the token-major (seq*bsz, E) projection outputs (no transposes);
#     a strided sublane slice selects the current batch element in-kernel.
#   * grid = (batch, query blocks, head blocks); head axis is 'arbitrary' and
#     accumulates the fused head-averaged attention weights.
#   * attention output is written batch-first (bsz, tgt, E), lane-dense (heads
#     packed into the last axis).
# ---------------------------------------------------------------------------
def _attention_kernel(q_ref, k_ref, v_ref, o_ref, w_ref, *,
                      bsz, src_len, q_tile, head_dim, n_heads_blk,
                      inv_num_heads, use_bf16):
    b = pl.program_id(0)
    h = pl.program_id(2)

    # Gather this batch element's rows out of the token-major layout (stride = bsz).
    q = q_ref[pl.ds(b, q_tile, stride=bsz), :]        # (q_tile, hb)
    k = k_ref[pl.ds(b, src_len, stride=bsz), :]       # (src_len, hb)
    v = v_ref[pl.ds(b, src_len, stride=bsz), :]       # (src_len, hb)

    @pl.when(h == 0)
    def _():
        w_ref[...] = jnp.zeros_like(w_ref)

    outs = []
    w_acc = jnp.zeros((q_tile, src_len), jnp.float32)
    for hh in range(n_heads_blk):
        sl = slice(hh * head_dim, (hh + 1) * head_dim)
        qh, kh, vh = q[:, sl], k[:, sl], v[:, sl]

        # scores = qh @ kh^T  (softmax scale already folded into the q projection)
        s = _mxu_dot(qh, kh, (((1,), (1,)), ((), ())), use_bf16)   # (q_tile, src_len)

        # Numerically-stable softmax along the src axis (matches F.softmax).
        s = s - jnp.max(s, axis=-1, keepdims=True)
        p = jnp.exp(s)
        # Exact reciprocal keeps the 1e-4 reference tolerance.
        # TODO(synk): validate pl.reciprocal(approx=True) (idle EUP slot) vs reference.
        p = p * pl.reciprocal(jnp.sum(p, axis=-1, keepdims=True), approx=False)

        outs.append(_mxu_dot(p, vh, (((1,), (0,)), ((), ())), use_bf16))  # (q_tile, D)
        w_acc = w_acc + p

    # Lane-dense store: all heads of this block packed into the last axis.
    o_ref[0] = outs[0] if len(outs) == 1 else jnp.concatenate(outs, axis=-1)
    # Fused head-average, accumulated across head-block grid steps.
    w_ref[0] += w_acc * inv_num_heads


def pallas_attention(q2d, k2d, v2d, *, bsz, num_heads, head_dim, tgt_len, src_len,
                     q_block=128, head_block=None, use_bf16=False):
    """q2d: (tgt*bsz, E), k2d/v2d: (src*bsz, E)  ->
       (attn_out (bsz, tgt, E), avg_weights (bsz, tgt, src))."""
    embed_dim = num_heads * head_dim

    # Query tile: a multiple of 8 (or the full length); ragged tail handled by cdiv
    # + masked partial blocks (softmax rows are independent, so padding is harmless).
    tl = tgt_len if tgt_len <= q_block else max(8, (q_block // 8) * 8)
    n_q = pl.cdiv(tgt_len, tl)

    # Head (lane-axis) tile: keeps K/V + score tiles VMEM-safe on v7x for long S.
    hb = head_block if head_block is not None else _pick_head_block(embed_dim, head_dim)
    n_h = embed_dim // hb
    n_heads_blk = hb // head_dim

    kernel = partial(
        _attention_kernel,
        bsz=bsz, src_len=src_len, q_tile=tl, head_dim=head_dim,
        n_heads_blk=n_heads_blk, inv_num_heads=1.0 / num_heads, use_bf16=use_bf16)

    block_bytes = 4 * (tl * bsz * hb + 2 * src_len * bsz * hb + tl * hb
                       + tl * src_len + n_heads_blk * tl * src_len)

    out, avg_w = pl.pallas_call(
        kernel,
        grid=(bsz, n_q, n_h),
        in_specs=[
            pl.BlockSpec((tl * bsz, hb), lambda b, i, h: (i, h)),
            pl.BlockSpec((src_len * bsz, hb), lambda b, i, h: (0, h)),
            pl.BlockSpec((src_len * bsz, hb), lambda b, i, h: (0, h)),
        ],
        out_specs=[
            pl.BlockSpec((1, tl, hb), lambda b, i, h: (b, i, h)),
            pl.BlockSpec((1, tl, src_len), lambda b, i, h: (b, i, 0)),
        ],
        out_shape=[
            jax.ShapeDtypeStruct((bsz, tgt_len, embed_dim), jnp.float32),
            jax.ShapeDtypeStruct((bsz, tgt_len, src_len), jnp.float32),
        ],
        compiler_params=pltpu.CompilerParams(
            dimension_semantics=("parallel", "parallel", "arbitrary"),
            vmem_limit_bytes=_vmem_limit(block_bytes),
        ),
    )(q2d, k2d, v2d)
    return out, avg_w


# ---------------------------------------------------------------------------
# Full forward pass (hot paths in Pallas; only free reshapes + one final transpose)
# ---------------------------------------------------------------------------
def eager_mha_forward(kparams, query, key, value, num_heads, *, use_bf16=False):
    """query/key/value: (seq, batch, embed) [batch_first=False].
    Returns (attn_out (tgt, bsz, E), avg attention weights (bsz, tgt, src))."""
    tgt_len, bsz, embed_dim = query.shape
    src_len = key.shape[0]
    head_dim = embed_dim // num_heads

    # Input projections on flat token-major rows; softmax scale already folded into q.
    q2d = pallas_linear(query.reshape(tgt_len * bsz, -1),
                        kparams["q_w"], kparams["q_b"], use_bf16=use_bf16)
    k2d = pallas_linear(key.reshape(src_len * bsz, -1),
                        kparams["k_w"], kparams["k_b"], use_bf16=use_bf16)
    v2d = pallas_linear(value.reshape(src_len * bsz, -1),
                        kparams["v_w"], kparams["v_b"], use_bf16=use_bf16)
    # TODO(synk): for self-attention (query is key is value) fuse the three
    # projections into one pallas_call on a concatenated (in, 3E) weight.

    # Attention reads the token-major projection outputs directly and writes a
    # lane-dense batch-first output + fused head-averaged weights (no HBM transposes).
    attn_bf, avg_weights = pallas_attention(
        q2d, k2d, v2d, bsz=bsz, num_heads=num_heads, head_dim=head_dim,
        tgt_len=tgt_len, src_len=src_len, use_bf16=use_bf16)

    # Output projection on batch-major rows.
    out_bf = pallas_linear(attn_bf.reshape(bsz * tgt_len, embed_dim),
                           kparams["o_w"], kparams["o_b"], use_bf16=use_bf16)

    # Single remaining layout change back to the module's (tgt, bsz, E) convention.
    # TODO(synk): fold this transpose into the out-projection kernel via a resident
    # (tl, bsz, E) output block written one batch column per 'arbitrary' grid step.
    out = out_bf.reshape(bsz, tgt_len, embed_dim).transpose(1, 0, 2)

    # need_weights=True, average_attn_weights=True (average already fused in-kernel).
    return out, avg_weights


# ---------------------------------------------------------------------------
# Parameters: PyTorch layout at init; one-time prep into kernel layout.
# ---------------------------------------------------------------------------
def init_params(key, embed_dim, kdim, vdim):
    """PyTorch-layout parameters: weights (out, in) xavier_uniform, zero biases."""
    def xavier(k, shape):
        fan_out, fan_in = shape
        bound = math.sqrt(6.0 / (fan_in + fan_out))
        return jax.random.uniform(k, shape, jnp.float32, -bound, bound)

    k1, k2, k3, k4 = jax.random.split(key, 4)
    return {
        "q_w": xavier(k1, (embed_dim, embed_dim)),
        "q_b": jnp.zeros((embed_dim,), jnp.float32),
        "k_w": xavier(k2, (embed_dim, kdim)),
        "k_b": jnp.zeros((embed_dim,), jnp.float32),
        "v_w": xavier(k3, (embed_dim, vdim)),
        "v_b": jnp.zeros((embed_dim,), jnp.float32),
        "o_w": xavier(k4, (embed_dim, embed_dim)),
        "o_b": jnp.zeros((embed_dim,), jnp.float32),
    }


def prepare_kernel_params(params, num_heads):
    """One-time transform into kernel layout: weights pre-transposed to (in, out) and
    the softmax scale (head_dim**-0.5) folded into the q projection weight + bias."""
    embed_dim = params["q_w"].shape[0]
    head_dim = embed_dim // num_heads
    scaling = float(head_dim) ** (-0.5)
    return {
        "q_w": params["q_w"].T * scaling,
        "q_b": params["q_b"] * scaling,
        "k_w": params["k_w"].T,
        "k_b": params["k_b"],
        "v_w": params["v_w"].T,
        "v_b": params["v_b"],
        "o_w": params["o_w"].T,
        "o_b": params["o_b"],
    }


# ---------------------------------------------------------------------------
# Pure-JAX reference (exact f32 matmuls) for the correctness check
# ---------------------------------------------------------------------------
def reference_mha(params, query, key, value, num_heads):
    tgt_len, bsz, embed_dim = query.shape
    src_len = key.shape[0]
    head_dim = embed_dim // num_heads
    scaling = float(head_dim) ** (-0.5)
    hp = jax.lax.Precision.HIGHEST

    q = jnp.einsum("tbi,oi->tbo", query, params["q_w"], precision=hp) + params["q_b"]
    k = jnp.einsum("sbi,oi->sbo", key, params["k_w"], precision=hp) + params["k_b"]
    v = jnp.einsum("sbi,oi->sbo", value, params["v_w"], precision=hp) + params["v_b"]

    q = q.reshape(tgt_len, bsz * num_heads, head_dim).transpose(1, 0, 2)
    k = k.reshape(src_len, bsz * num_heads, head_dim).transpose(1, 0, 2)
    v = v.reshape(src_len, bsz * num_heads, head_dim).transpose(1, 0, 2)

    s = jnp.einsum("bld,bsd->bls", q, k, precision=hp) * scaling
    p = jax.nn.softmax(s, axis=-1)
    o = jnp.einsum("bls,bsd->bld", p, v, precision=hp)
    o = o.transpose(1, 0, 2).reshape(tgt_len, bsz, embed_dim)
    o = jnp.einsum("tbi,oi->tbo", o, params["o_w"], precision=hp) + params["o_b"]
    w = p.reshape(bsz, num_heads, tgt_len, src_len).mean(axis=1)
    return o, w


if __name__ == "__main__":
    # Small shapes: seq=8, batch=2, embed_dim=32, num_heads=4 (head_dim=8)
    seq_len, batch, embed_dim, num_heads = 8, 2, 32, 4

    root = jax.random.PRNGKey(0)
    kp, kq, kk, kv = jax.random.split(root, 4)

    params = init_params(kp, embed_dim, embed_dim, embed_dim)
    kparams = prepare_kernel_params(params, num_heads)

    # (seq, batch, embed) inputs, batch_first=False convention
    query = jax.random.normal(kq, (seq_len, batch, embed_dim), jnp.float32)
    key = jax.random.normal(kk, (seq_len, batch, embed_dim), jnp.float32)
    value = jax.random.normal(kv, (seq_len, batch, embed_dim), jnp.float32)

    out, weights = eager_mha_forward(kparams, query, key, value, num_heads)
    out = jax.block_until_ready(out)
    weights = jax.block_until_ready(weights)

    ref_out, ref_w = reference_mha(params, query, key, value, num_heads)
    assert out.shape == (seq_len, batch, embed_dim)
    assert weights.shape == (batch, seq_len, seq_len)
    assert jnp.allclose(out, ref_out, atol=1e-4, rtol=1e-4), \
        float(jnp.max(jnp.abs(out - ref_out)))
    assert jnp.allclose(weights, ref_w, atol=1e-4, rtol=1e-4), \
        float(jnp.max(jnp.abs(weights - ref_w)))

    print("KERNEL_OK")
</pallas_src>

<mosaic_0001>
module attributes {stable_mosaic.version = 11 : i64} {
  func.func @_linear_kernel(%arg0: i32, %arg1: i32, %arg2: i32, %arg3: memref<16x32xf32, #tpu.memory_space<vmem>>, %arg4: memref<32x32xf32, #tpu.memory_space<vmem>>, %arg5: memref<1x32xf32, #tpu.memory_space<vmem>>, %arg6: memref<16x32xf32, #tpu.memory_space<vmem>>, %arg7: memref<16x32xf32, #tpu.memory_space<vmem>>) attributes {dimension_semantics = [#tpu.dimension_semantics<parallel>, #tpu.dimension_semantics<parallel>, #tpu.dimension_semantics<arbitrary>], iteration_bounds = array<i64: 1, 1, 1>, scalar_prefetch = 0 : i64, scratch_operands = 1 : i64, tpu.core_type = #tpu.core_type<tc>, window_params = [{transform_indices = @transform_0, window_bounds = array<i64: 16, 32>}, {transform_indices = @transform_1, window_bounds = array<i64: 32, 32>}, {transform_indices = @transform_2, window_bounds = array<i64: 1, 32>}, {transform_indices = @transform_3, window_bounds = array<i64: 16, 32>}]} {
    %c0_i32 = arith.constant 0 : i32
    %0 = arith.cmpi eq, %arg2, %c0_i32 : i32
    %1 = arith.extui %0 : i1 to i32
    %c0_i32_0 = arith.constant 0 : i32
    %2 = arith.cmpi ne, %1, %c0_i32_0 : i32
    scf.if %2 {
      %cst_10 = arith.constant 0.000000e+00 : f32
      %12 = vector.broadcast %cst_10 : f32 to vector<16x32xf32>
      %c0_11 = arith.constant 0 : index
      %c0_12 = arith.constant 0 : index
      %13 = vector.load %arg7[%c0_11, %c0_12] : memref<16x32xf32, #tpu.memory_space<vmem>>, vector<16x32xf32>
      tpu.vector_store %arg7[%c0_11, %c0_12], %12 {strides = array<i32>} : memref<16x32xf32, #tpu.memory_space<vmem>>, vector<16x32xf32>,
    } else {
    }
    %c0 = arith.constant 0 : index
    %c0_1 = arith.constant 0 : index
    %3 = vector.load %arg7[%c0, %c0_1] : memref<16x32xf32, #tpu.memory_space<vmem>>, vector<16x32xf32>
    %c0_2 = arith.constant 0 : index
    %c0_3 = arith.constant 0 : index
    %4 = vector.load %arg3[%c0_2, %c0_3] : memref<16x32xf32, #tpu.memory_space<vmem>>, vector<16x32xf32>
    %c0_4 = arith.constant 0 : index
    %c0_5 = arith.constant 0 : index
    %5 = vector.load %arg4[%c0_4, %c0_5] : memref<32x32xf32, #tpu.memory_space<vmem>>, vector<32x32xf32>
    %cst = arith.constant dense<0.000000e+00> : vector<16x32xf32>
    %6 = tpu.matmul %4, %5, %cst {dimension_numbers = #tpu.dot_dimension_numbers<[1], [0], [0], [1], [0, 0, 1, 1], [], []>, precision = #tpu.contract_precision<fp32>} : vector<16x32xf32>, vector<32x32xf32>, vector<16x32xf32> -> vector<16x32xf32>
    %7 = arith.addf %3, %6 : vector<16x32xf32>
    %c0_6 = arith.constant 0 : index
    %c0_7 = arith.constant 0 : index
    %8 = vector.load %arg7[%c0_6, %c0_7] : memref<16x32xf32, #tpu.memory_space<vmem>>, vector<16x32xf32>
    tpu.vector_store %arg7[%c0_6, %c0_7], %7 {strides = array<i32>} : memref<16x32xf32, #tpu.memory_space<vmem>>, vector<16x32xf32>,
    %c0_i32_8 = arith.constant 0 : i32
    %9 = arith.cmpi eq, %arg2, %c0_i32_8 : i32
    %10 = arith.extui %9 : i1 to i32
    %c0_i32_9 = arith.constant 0 : i32
    %11 = arith.cmpi ne, %10, %c0_i32_9 : i32
    scf.if %11 {
      %c0_10 = arith.constant 0 : index
      %c0_11 = arith.constant 0 : index
      %12 = vector.load %arg7[%c0_10, %c0_11] : memref<16x32xf32, #tpu.memory_space<vmem>>, vector<16x32xf32>
      %c0_12 = arith.constant 0 : index
      %c0_13 = arith.constant 0 : index
      %13 = vector.load %arg5[%c0_12, %c0_13] : memref<1x32xf32, #tpu.memory_space<vmem>>, vector<1x32xf32>
      %14 = vector.broadcast %13 : vector<1x32xf32> to vector<16x32xf32>
      %15 = arith.addf %12, %14 : vector<16x32xf32>
      %c0_14 = arith.constant 0 : index
      %c0_15 = arith.constant 0 : index
      %16 = vector.load %arg6[%c0_14, %c0_15] : memref<16x32xf32, #tpu.memory_space<vmem>>, vector<16x32xf32>
      tpu.vector_store %arg6[%c0_14, %c0_15], %15 {strides = array<i32>} : memref<16x32xf32, #tpu.memory_space<vmem>>, vector<16x32xf32>,
    } else {
    }
    return
  }
  func.func @transform_0(%arg0: i32, %arg1: i32, %arg2: i32) -> (i32, i32) {
    %c0_i32 = arith.constant 0 : i32
    return %arg0, %arg2 : i32, i32
  }
  func.func @transform_1(%arg0: i32, %arg1: i32, %arg2: i32) -> (i32, i32) {
    %c0_i32 = arith.constant 0 : i32
    return %arg2, %arg1 : i32, i32
  }
  func.func @transform_2(%arg0: i32, %arg1: i32, %arg2: i32) -> (i32, i32) {
    %c0_i32 = arith.constant 0 : i32
    %c0_i32_0 = arith.constant 0 : i32
    return %c0_i32, %arg1 : i32, i32
  }
  func.func @transform_3(%arg0: i32, %arg1: i32, %arg2: i32) -> (i32, i32) {
    %c0_i32 = arith.constant 0 : i32
    return %arg0, %arg1 : i32, i32
  }
}

</mosaic_0001>

<llo_original>
// kernel: tpu_custom_call.1
$region0: #{tpu_custom_call.1}
  #allocation0 [shape = 'u32[]', space=smem, size = 0x4, offset = 0x4, fixed_abs, tag = 'smem constant byte address 0x4 - core index']
  #allocation1 [shape = 'u32[144,128]{1,0:T(1,128)}', space=vmem, size = 0x12000, scoped, tag = 'internal scratch']
  #allocation2 [shape = 'f32[16,32]{1,0:T(8,128)}', space=vmem, size = 0x2000, scoped, tag = 'scratch operand']
  %s0 = inlined_call_operand.hbm [shape: f32[16,32], index: 0, kind: input, shape index: {}]
  %s1 = inlined_call_operand.hbm [shape: f32[32,32], index: 1, kind: input, shape index: {}]
  %s2 = inlined_call_operand.vmem [shape: f32[1,32], index: 2, kind: input, shape index: {}]
  %s3 = inlined_call_operand.hbm [shape: f32[16,32], index: 3, kind: output, shape index: {}]
  %s4 = sld [smem:[#allocation0]]
  $region38: #{tpu_custom_call.1} parent=0
    _
  %s6 = ssub.s32 1, %s4
  %s7 = scalar_select 0, %s6, %s4
  $region1: #{tpu_custom_call.1} parent=0
    #allocation3 [shape = 'u8[8192]{0}', space=vmem, size = 0x2000, scoped, tag = 'input window, operand 0, single buffered']
    #allocation4 [shape = 's32[1]{0}', space=sflag, size = 0x4, scoped, tag = 'scoped memory for tpu_custom_call.1']
    #allocation5 [shape = 's32[1]{0}', space=sflag, size = 0x4, scoped, tag = 'scoped memory for tpu_custom_call.1']
    #allocation6 [shape = 'u8[16384]{0}', space=vmem, size = 0x4000, scoped, tag = 'input window, operand 1, single buffered']
    #allocation7 [shape = 's32[1]{0}', space=sflag, size = 0x4, scoped, tag = 'scoped memory for tpu_custom_call.1']
    #allocation8 [shape = 'u8[8192]{0}', space=vmem, size = 0x2000, scoped, tag = 'output window, operand 0, single buffered']
    %8 = vsyncpa [#allocation4], 0
    %9 = vsyncpa [#allocation7], 0
    %10 = vsyncpa [#allocation5], 0
    // Predicated region
    $region2: #{tpu_custom_call.1} parent=1 // pred_check
      _
    $region3: #{tpu_custom_call.1} parent=1 // pred_check_branch
      %12 = sbr.rel (0) target = $region5
    $region4: #{tpu_custom_call.1} parent=1 // pred_region
      %s14 = ssub.s32 256, 256
      %15 = vsyncadd [#allocation4], %s14
      %s16 = sshll.u32 [#allocation3], 4
      %s17 = int_to_ptr.vmem [resolvable:$true] %s16
      %22 = dma.hbm_to_vmem [thread:$0]  %s0, 256, %s17, [#allocation4], 128, 128, 8
    $region5: #{tpu_custom_call.1} parent=1 // pred_fallthru
      _
    // Predicated region
    $region6: #{tpu_custom_call.1} parent=1 // pred_check
      _
    $region7: #{tpu_custom_call.1} parent=1 // pred_check_branch
      %24 = sbr.rel (0) target = $region9
    $region8: #{tpu_custom_call.1} parent=1 // pred_region
      %s26 = ssub.s32 512, 512
      %27 = vsyncadd [#allocation7], %s26
      %s28 = sshll.u32 [#allocation6], 4
      %s29 = int_to_ptr.vmem [resolvable:$true] %s28
      %34 = dma.hbm_to_vmem [thread:$0]  %s1, 512, %s29, [#allocation7], 128, 128, 8
    $region9: #{tpu_custom_call.1} parent=1 // pred_fallthru
      _
    // Predicated region
    $region10: #{tpu_custom_call.1} parent=1 // pred_check
      _
    $region11: #{tpu_custom_call.1} parent=1 // pred_check_branch
      %36 = sbr.rel (0) target = $region13
    $region12: #{tpu_custom_call.1} parent=1 // pred_region
      _
    $region13: #{tpu_custom_call.1} parent=1 // pred_fallthru
      _
    // Predicated region
    $region14: #{tpu_custom_call.1} parent=1 // pred_check
      _
    $region15: #{tpu_custom_call.1} parent=1 // pred_check_branch
      %38 = sbr.rel (0) target = $region17
    $region16: #{tpu_custom_call.1} parent=1 // pred_region
      %39 = dma.done [#allocation4], 256
    $region17: #{tpu_custom_call.1} parent=1 // pred_fallthru
      _
    // Predicated region
    $region18: #{tpu_custom_call.1} parent=1 // pred_check
      _
    $region19: #{tpu_custom_call.1} parent=1 // pred_check_branch
      %41 = sbr.rel (0) target = $region21
    $region20: #{tpu_custom_call.1} parent=1 // pred_region
      %42 = dma.done [#allocation7], 512
    $region21: #{tpu_custom_call.1} parent=1 // pred_fallthru
      _
    %p43 = scmp.eq.s32.totalorder 0, 0
    // Predicated region
    $region22: #{tpu_custom_call.1} parent=1 // pred_check
      %p44 = pneg %p43
    $region23: #{tpu_custom_call.1} parent=1 // pred_check_branch
      %46 = sbr.rel (%p44) target = $region25
    $region24: #{tpu_custom_call.1} parent=1 // pred_region
      %vm47 = vcmask 261120
      %48 = vst.msk [vmem:[#allocation2] sm:$0xff] %vm47, 0.0
      %49 = vst.msk [vmem:[#allocation2 + $0x8] sm:$0xff] %vm47, 0.0
    $region25: #{tpu_custom_call.1} parent=1 // pred_fallthru
      _
    %v50 = vld [vmem:[#allocation2] sm:$0xff]
    %v51 = vld [vmem:[#allocation2 + $0x8] sm:$0xff]
    %v52 = vld [vmem:[#allocation3] sm:$0xff]
    %v53 = vld [vmem:[#allocation3 + $0x8] sm:$0xff]
    %v54 = vld [vmem:[#allocation6] sm:$0xff]
    %v55 = vld [vmem:[#allocation6 + $0x8] sm:$0xff]
    %v56 = vld [vmem:[#allocation6 + $0x10] sm:$0xff]
    %v57 = vld [vmem:[#allocation6 + $0x18] sm:$0xff]
    %vm58 = vcmask 261120
    %v60 = vsel %vm58, %v52, 0
    %v63 = vsel %vm58, %v53, 0
    %65 = vmatprep.subr.mxu0 0.0
    %v66 = vand.u32 %v54, 4294901760
    %67 = vmatpush1.msra.mxu0 %v66
    %68 = vmatprep.subr.mxu0 0.0
    %v69 = vand.u32 %v55, 4294901760
    %70 = vmatpush1.msra.mxu0 %v69
    %71 = vmatprep.subr.mxu0 0.0
    %v72 = vand.u32 %v56, 4294901760
    %73 = vmatpush1.msra.mxu0 %v72
    %74 = vmatprep.subr.mxu0 0.0
    %v75 = vand.u32 %v57, 4294901760
    %76 = vmatpush1.msra.mxu0 %v75
    %77 = vmatprep.subr.mxu0 0.0
    %78 = vmatpush1.msra.mxu0 0.0
    %79 = vmatprep.subr.mxu0 0.0
    %80 = vmatpush1.msra.mxu0 0.0
    %81 = vmatprep.subr.mxu0 0.0
    %82 = vmatpush1.msra.mxu0 0.0
    %83 = vmatprep.subr.mxu0 0.0
    %84 = vmatpush1.msra.mxu0 0.0
    %85 = vmatprep.subr.mxu0 0.0
    %86 = vmatpush1.msra.mxu0 0.0
    %87 = vmatprep.subr.mxu0 0.0
    %88 = vmatpush1.msra.mxu0 0.0
    %89 = vmatprep.subr.mxu0 0.0
    %90 = vmatpush1.msra.mxu0 0.0
    %91 = vmatprep.subr.mxu0 0.0
    %92 = vmatpush1.msra.mxu0 0.0
    %93 = vmatprep.subr.mxu0 0.0
    %94 = vmatpush1.msra.mxu0 0.0
    %95 = vmatprep.subr.mxu0 0.0
    %96 = vmatpush1.msra.mxu0 0.0
    %97 = vmatprep.subr.mxu0 0.0
    %98 = vmatpush1.msra.mxu0 0.0
    %99 = vmatprep.subr.mxu0 0.0
    %100 = vmatpush1.msra.mxu0 0.0
    %101 = vmatprep.subr.mxu0 0.0
    %102 = vmatpush1.msra.mxu0 0.0
    %103 = vmatprep.subr.mxu0 0.0
    %104 = vmatpush1.msra.mxu0 0.0
    %105 = vmatprep.subr.mxu0 0.0
    %106 = vmatpush1.msra.mxu0 0.0
    %107 = vmatprep.subr.mxu0 0.0
    %108 = vmatpush1.msra.mxu0 0.0
    %109 = vmatprep.subr.mxu0 0.0
    %110 = vmatpush1.msra.mxu0 0.0
    %111 = vmatprep.subr.mxu0 0.0
    %112 = vmatpush1.msra.mxu0 0.0
    %113 = vmatprep.subr.mxu0 0.0
    %114 = vmatpush1.msra.mxu0 0.0
    %115 = vmatprep.subr.mxu0 0.0
    %116 = vmatpush1.msra.mxu0 0.0
    %117 = vmatprep.subr.mxu0 0.0
    %118 = vmatpush1.msra.mxu0 0.0
    %119 = vmatprep.subr.mxu0 0.0
    %120 = vmatpush1.msra.mxu0 0.0
    %121 = vmatprep.subr.mxu0 0.0
    %122 = vmatpush1.msra.mxu0 0.0
    %123 = vmatprep.subr.mxu0 0.0
    %124 = vmatpush1.msra.mxu0 0.0
    %125 = vmatprep.subr.mxu0 0.0
    %126 = vmatpush1.msra.mxu0 0.0
    %127 = vmatprep.subr.mxu0 0.0
    %128 = vmatpush1.msra.mxu0 0.0
    %129 = vmatprep.subr.mxu0 0.0
    %130 = vmatpush1.msra.mxu0 0.0
    %131 = vmatprep.subr.mxu0 0.0
    %132 = vmatpush1.msra.mxu0 0.0
    %133 = vmatprep.mubr.f32.mxu0 0.0
    %v134 = vand.u32 %v60, 4294901760
    %v135 = vsub.f32 %v60, %v134
    %v136 = vand.u32 %v135, 4294901760
    %v137 = vsub.f32 %v135, %v136
    %v138 = vand.u32 %v137, 4294901760
    %139 = vmatmul.mubr.f32.gmra.mrb[0].mxu0 %v138
    %v140 = vpop.f32.mrb[0].mxu0
    %v141 = vadd.f32 0.0, %v140
    %v142 = vpop.f32.mrb[0].mxu0
    %143 = vmatprep.mubr.f32.mxu0 0.0
    %v144 = vand.u32 %v63, 4294901760
    %v145 = vsub.f32 %v63, %v144
    %v146 = vand.u32 %v145, 4294901760
    %v147 = vsub.f32 %v145, %v146
    %v148 = vand.u32 %v147, 4294901760
    %149 = vmatmul.mubr.f32.gmra.mrb[0].mxu0 %v148
    %v150 = vpop.f32.mrb[0].mxu0
    %v151 = vadd.f32 0.0, %v150
    %v152 = vpop.f32.mrb[0].mxu0
    %153 = vdwg.mxu0
    %154 = vmatprep.subr.mxu0 0.0
    %v155 = vand.u32 %v54, 4294901760
    %v156 = vsub.f32 %v54, %v155
    %v157 = vand.u32 %v156, 4294901760
    %v158 = vsub.f32 %v156, %v157
    %v159 = vand.u32 %v158, 4294901760
    %160 = vmatpush1.msra.mxu0 %v159
    %161 = vmatprep.subr.mxu0 0.0
    %v162 = vand.u32 %v55, 4294901760
    %v163 = vsub.f32 %v55, %v162
    %v164 = vand.u32 %v163, 4294901760
    %v165 = vsub.f32 %v163, %v164
    %v166 = vand.u32 %v165, 4294901760
    %167 = vmatpush1.msra.mxu0 %v166
    %168 = vmatprep.subr.mxu0 0.0
    %v169 = vand.u32 %v56, 4294901760
    %v170 = vsub.f32 %v56, %v169
    %v171 = vand.u32 %v170, 4294901760
    %v172 = vsub.f32 %v170, %v171
    %v173 = vand.u32 %v172, 4294901760
    %174 = vmatpush1.msra.mxu0 %v173
    %175 = vmatprep.subr.mxu0 0.0
    %v176 = vand.u32 %v57, 4294901760
    %v177 = vsub.f32 %v57, %v176
    %v178 = vand.u32 %v177, 4294901760
    %v179 = vsub.f32 %v177, %v178
    %v180 = vand.u32 %v179, 4294901760
    %181 = vmatpush1.msra.mxu0 %v180
    %182 = vmatprep.subr.mxu0 0.0
    %183 = vmatpush1.msra.mxu0 0.0
    %184 = vmatprep.subr.mxu0 0.0
    %185 = vmatpush1.msra.mxu0 0.0
    %186 = vmatprep.subr.mxu0 0.0
    %187 = vmatpush1.msra.mxu0 0.0
    %188 = vmatprep.subr.mxu0 0.0
    %189 = vmatpush1.msra.mxu0 0.0
    %190 = vmatprep.subr.mxu0 0.0
    %191 = vmatpush1.msra.mxu0 0.0
    %192 = vmatprep.subr.mxu0 0.0
    %193 = vmatpush1.msra.mxu0 0.0
    %194 = vmatprep.subr.mxu0 0.0
    %195 = vmatpush1.msra.mxu0 0.0
    %196 = vmatprep.subr.mxu0 0.0
    %197 = vmatpush1.msra.mxu0 0.0
    %198 = vmatprep.subr.mxu0 0.0
    %199 = vmatpush1.msra.mxu0 0.0
    %200 = vmatprep.subr.mxu0 0.0
    %201 = vmatpush1.msra.mxu0 0.0
    %202 = vmatprep.subr.mxu0 0.0
    %203 = vmatpush1.msra.mxu0 0.0
    %204 = vmatprep.subr.mxu0 0.0
    %205 = vmatpush1.msra.mxu0 0.0
    %206 = vmatprep.subr.mxu0 0.0
    %207 = vmatpush1.msra.mxu0 0.0
    %208 = vmatprep.subr.mxu0 0.0
    %209 = vmatpush1.msra.mxu0 0.0
    %210 = vmatprep.subr.mxu0 0.0
    %211 = vmatpush1.msra.mxu0 0.0
    %212 = vmatprep.subr.mxu0 0.0
    %213 = vmatpush1.msra.mxu0 0.0
    %214 = vmatprep.subr.mxu0 0.0
    %215 = vmatpush1.msra.mxu0 0.0
    %216 = vmatprep.subr.mxu0 0.0
    %217 = vmatpush1.msra.mxu0 0.0
    %218 = vmatprep.subr.mxu0 0.0
    %219 = vmatpush1.msra.mxu0 0.0
    %220 = vmatprep.subr.mxu0 0.0
    %221 = vmatpush1.msra.mxu0 0.0
    %222 = vmatprep.subr.mxu0 0.0
    %223 = vmatpush1.msra.mxu0 0.0
    %224 = vmatprep.subr.mxu0 0.0
    %225 = vmatpush1.msra.mxu0 0.0
    %226 = vmatprep.subr.mxu0 0.0
    %227 = vmatpush1.msra.mxu0 0.0
    %228 = vmatprep.subr.mxu0 0.0
    %229 = vmatpush1.msra.mxu0 0.0
    %230 = vmatprep.subr.mxu0 0.0
    %231 = vmatpush1.msra.mxu0 0.0
    %232 = vmatprep.subr.mxu0 0.0
    %233 = vmatpush1.msra.mxu0 0.0
    %234 = vmatprep.subr.mxu0 0.0
    %235 = vmatpush1.msra.mxu0 0.0
    %236 = vmatprep.subr.mxu0 0.0
    %237 = vmatpush1.msra.mxu0 0.0
    %238 = vmatprep.mubr.f32.mxu0 0.0
    %v239 = vand.u32 %v60, 4294901760
    %240 = vmatmul.mubr.f32.gmra.mrb[0].mxu0 %v239
    %v241 = vpop.f32.mrb[0].mxu0
    %v242 = vadd.f32 %v141, %v241
    %v243 = vpop.f32.mrb[0].mxu0
    %244 = vmatprep.mubr.f32.mxu0 0.0
    %v245 = vand.u32 %v63, 4294901760
    %246 = vmatmul.mubr.f32.gmra.mrb[0].mxu0 %v245
    %v247 = vpop.f32.mrb[0].mxu0
    %v248 = vadd.f32 %v151, %v247
    %v249 = vpop.f32.mrb[0].mxu0
    %250 = vdwg.mxu0
    %251 = vmatprep.subr.mxu0 0.0
    %v252 = vand.u32 %v54, 4294901760
    %v253 = vsub.f32 %v54, %v252
    %254 = vmatpush1.msra.mxu0 %v253
    %255 = vmatprep.subr.mxu0 0.0
    %v256 = vand.u32 %v55, 4294901760
    %v257 = vsub.f32 %v55, %v256
    %258 = vmatpush1.msra.mxu0 %v257
    %259 = vmatprep.subr.mxu0 0.0
    %v260 = vand.u32 %v56, 4294901760
    %v261 = vsub.f32 %v56, %v260
    %262 = vmatpush1.msra.mxu0 %v261
    %263 = vmatprep.subr.mxu0 0.0
    %v264 = vand.u32 %v57, 4294901760
    %v265 = vsub.f32 %v57, %v264
    %266 = vmatpush1.msra.mxu0 %v265
    %267 = vmatprep.subr.mxu0 0.0
    %268 = vmatpush1.msra.mxu0 0.0
    %269 = vmatprep.subr.mxu0 0.0
    %270 = vmatpush1.msra.mxu0 0.0
    %271 = vmatprep.subr.mxu0 0.0
    %272 = vmatpush1.msra.mxu0 0.0
    %273 = vmatprep.subr.mxu0 0.0
    %274 = vmatpush1.msra.mxu0 0.0
    %275 = vmatprep.subr.mxu0 0.0
    %276 = vmatpush1.msra.mxu0 0.0
    %277 = vmatprep.subr.mxu0 0.0
    %278 = vmatpush1.msra.mxu0 0.0
    %279 = vmatprep.subr.mxu0 0.0
    %280 = vmatpush1.msra.mxu0 0.0
    %281 = vmatprep.subr.mxu0 0.0
    %282 = vmatpush1.msra.mxu0 0.0
    %283 = vmatprep.subr.mxu0 0.0
    %284 = vmatpush1.msra.mxu0 0.0
    %285 = vmatprep.subr.mxu0 0.0
    %286 = vmatpush1.msra.mxu0 0.0
    %287 = vmatprep.subr.mxu0 0.0
    %288 = vmatpush1.msra.mxu0 0.0
    %289 = vmatprep.subr.mxu0 0.0
    %290 = vmatpush1.msra.mxu0 0.0
    %291 = vmatprep.subr.mxu0 0.0
    %292 = vmatpush1.msra.mxu0 0.0
    %293 = vmatprep.subr.mxu0 0.0
    %294 = vmatpush1.msra.mxu0 0.0
    %295 = vmatprep.subr.mxu0 0.0
    %296 = vmatpush1.msra.mxu0 0.0
    %297 = vmatprep.subr.mxu0 0.0
    %298 = vmatpush1.msra.mxu0 0.0
    %299 = vmatprep.subr.mxu0 0.0
    %300 = vmatpush1.msra.mxu0 0.0
    %301 = vmatprep.subr.mxu0 0.0
    %302 = vmatpush1.msra.mxu0 0.0
    %303 = vmatprep.subr.mxu0 0.0
    %304 = vmatpush1.msra.mxu0 0.0
    %305 = vmatprep.subr.mxu0 0.0
    %306 = vmatpush1.msra.mxu0 0.0
    %307 = vmatprep.subr.mxu0 0.0
    %308 = vmatpush1.msra.mxu0 0.0
    %309 = vmatprep.subr.mxu0 0.0
    %310 = vmatpush1.msra.mxu0 0.0
    %311 = vmatprep.subr.mxu0 0.0
    %312 = vmatpush1.msra.mxu0 0.0
    %313 = vmatprep.subr.mxu0 0.0
    %314 = vmatpush1.msra.mxu0 0.0
    %315 = vmatprep.subr.mxu0 0.0
    %316 = vmatpush1.msra.mxu0 0.0
    %317 = vmatprep.subr.mxu0 0.0
    %318 = vmatpush1.msra.mxu0 0.0
    %319 = vmatprep.subr.mxu0 0.0
    %320 = vmatpush1.msra.mxu0 0.0
    %321 = vmatprep.subr.mxu0 0.0
    %322 = vmatpush1.msra.mxu0 0.0
    %323 = vmatprep.mubr.f32.mxu0 0.0
    %v324 = vand.u32 %v60, 4294901760
    %v325 = vsub.f32 %v60, %v324
    %326 = vmatmul.mubr.f32.gmra.mrb[0].mxu0 %v325
    %v327 = vpop.f32.mrb[0].mxu0
    %v328 = vadd.f32 %v242, %v327
    %v329 = vpop.f32.mrb[0].mxu0
    %330 = vmatprep.mubr.f32.mxu0 0.0
    %v331 = vand.u32 %v63, 4294901760
    %v332 = vsub.f32 %v63, %v331
    %333 = vmatmul.mubr.f32.gmra.mrb[0].mxu0 %v332
    %v334 = vpop.f32.mrb[0].mxu0
    %v335 = vadd.f32 %v248, %v334
    %v336 = vpop.f32.mrb[0].mxu0
    %337 = vdwg.mxu0
    %338 = vmatprep.subr.mxu0 0.0
    %v339 = vand.u32 %v54, 4294901760
    %340 = vmatpush1.msra.mxu0 %v339
    %341 = vmatprep.subr.mxu0 0.0
    %v342 = vand.u32 %v55, 4294901760
    %343 = vmatpush1.msra.mxu0 %v342
    %344 = vmatprep.subr.mxu0 0.0
    %v345 = vand.u32 %v56, 4294901760
    %346 = vmatpush1.msra.mxu0 %v345
    %347 = vmatprep.subr.mxu0 0.0
    %v348 = vand.u32 %v57, 4294901760
    %349 = vmatpush1.msra.mxu0 %v348
    %350 = vmatprep.subr.mxu0 0.0
    %351 = vmatpush1.msra.mxu0 0.0
    %352 = vmatprep.subr.mxu0 0.0
    %353 = vmatpush1.msra.mxu0 0.0
    %354 = vmatprep.subr.mxu0 0.0
    %355 = vmatpush1.msra.mxu0 0.0
    %356 = vmatprep.subr.mxu0 0.0
    %357 = vmatpush1.msra.mxu0 0.0
    %358 = vmatprep.subr.mxu0 0.0
    %359 = vmatpush1.msra.mxu0 0.0
    %360 = vmatprep.subr.mxu0 0.0
    %361 = vmatpush1.msra.mxu0 0.0
    %362 = vmatprep.subr.mxu0 0.0
    %363 = vmatpush1.msra.mxu0 0.0
    %364 = vmatprep.subr.mxu0 0.0
    %365 = vmatpush1.msra.mxu0 0.0
    %366 = vmatprep.subr.mxu0 0.0
    %367 = vmatpush1.msra.mxu0 0.0
    %368 = vmatprep.subr.mxu0 0.0
    %369 = vmatpush1.msra.mxu0 0.0
    %370 = vmatprep.subr.mxu0 0.0
    %371 = vmatpush1.msra.mxu0 0.0
    %372 = vmatprep.subr.mxu0 0.0
    %373 = vmatpush1.msra.mxu0 0.0
    %374 = vmatprep.subr.mxu0 0.0
    %375 = vmatpush1.msra.mxu0 0.0
    %376 = vmatprep.subr.mxu0 0.0
    %377 = vmatpush1.msra.mxu0 0.0
    %378 = vmatprep.subr.mxu0 0.0
    %379 = vmatpush1.msra.mxu0 0.0
    %380 = vmatprep.subr.mxu0 0.0
    %381 = vmatpush1.msra.mxu0 0.0
    %382 = vmatprep.subr.mxu0 0.0
    %383 = vmatpush1.msra.mxu0 0.0
    %384 = vmatprep.subr.mxu0 0.0
    %385 = vmatpush1.msra.mxu0 0.0
    %386 = vmatprep.subr.mxu0 0.0
    %387 = vmatpush1.msra.mxu0 0.0
    %388 = vmatprep.subr.mxu0 0.0
    %389 = vmatpush1.msra.mxu0 0.0
    %390 = vmatprep.subr.mxu0 0.0
    %391 = vmatpush1.msra.mxu0 0.0
    %392 = vmatprep.subr.mxu0 0.0
    %393 = vmatpush1.msra.mxu0 0.0
    %394 = vmatprep.subr.mxu0 0.0
    %395 = vmatpush1.msra.mxu0 0.0
    %396 = vmatprep.subr.mxu0 0.0
    %397 = vmatpush1.msra.mxu0 0.0
    %398 = vmatprep.subr.mxu0 0.0
    %399 = vmatpush1.msra.mxu0 0.0
    %400 = vmatprep.subr.mxu0 0.0
    %401 = vmatpush1.msra.mxu0 0.0
    %402 = vmatprep.subr.mxu0 0.0
    %403 = vmatpush1.msra.mxu0 0.0
    %404 = vmatprep.subr.mxu0 0.0
    %405 = vmatpush1.msra.mxu0 0.0
    %406 = vmatprep.mubr.f32.mxu0 0.0
    %v407 = vand.u32 %v60, 4294901760
    %v408 = vsub.f32 %v60, %v407
    %v409 = vand.u32 %v408, 4294901760
    %410 = vmatmul.mubr.f32.gmra.mrb[0].mxu0 %v409
    %v411 = vpop.f32.mrb[0].mxu0
    %v412 = vadd.f32 %v328, %v411
    %v413 = vpop.f32.mrb[0].mxu0
    %414 = vmatprep.mubr.f32.mxu0 0.0
    %v415 = vand.u32 %v63, 4294901760
    %v416 = vsub.f32 %v63, %v415
    %v417 = vand.u32 %v416, 4294901760
    %418 = vmatmul.mubr.f32.gmra.mrb[0].mxu0 %v417
    %v419 = vpop.f32.mrb[0].mxu0
    %v420 = vadd.f32 %v335, %v419
    %v421 = vpop.f32.mrb[0].mxu0
    %422 = vdwg.mxu0
    %423 = vmatprep.subr.mxu0 0.0
    %v424 = vand.u32 %v54, 4294901760
    %v425 = vsub.f32 %v54, %v424
    %v426 = vand.u32 %v425, 4294901760
    %427 = vmatpush1.msra.mxu0 %v426
    %428 = vmatprep.subr.mxu0 0.0
    %v429 = vand.u32 %v55, 4294901760
    %v430 = vsub.f32 %v55, %v429
    %v431 = vand.u32 %v430, 4294901760
    %432 = vmatpush1.msra.mxu0 %v431
    %433 = vmatprep.subr.mxu0 0.0
    %v434 = vand.u32 %v56, 4294901760
    %v435 = vsub.f32 %v56, %v434
    %v436 = vand.u32 %v435, 4294901760
    %437 = vmatpush1.msra.mxu0 %v436
    %438 = vmatprep.subr.mxu0 0.0
    %v439 = vand.u32 %v57, 4294901760
    %v440 = vsub.f32 %v57, %v439
    %v441 = vand.u32 %v440, 4294901760
    %442 = vmatpush1.msra.mxu0 %v441
    %443 = vmatprep.subr.mxu0 0.0
    %444 = vmatpush1.msra.mxu0 0.0
    %445 = vmatprep.subr.mxu0 0.0
    %446 = vmatpush1.msra.mxu0 0.0
    %447 = vmatprep.subr.mxu0 0.0
    %448 = vmatpush1.msra.mxu0 0.0
    %449 = vmatprep.subr.mxu0 0.0
    %450 = vmatpush1.msra.mxu0 0.0
    %451 = vmatprep.subr.mxu0 0.0
    %452 = vmatpush1.msra.mxu0 0.0
    %453 = vmatprep.subr.mxu0 0.0
    %454 = vmatpush1.msra.mxu0 0.0
    %455 = vmatprep.subr.mxu0 0.0
    %456 = vmatpush1.msra.mxu0 0.0
    %457 = vmatprep.subr.mxu0 0.0
    %458 = vmatpush1.msra.mxu0 0.0
    %459 = vmatprep.subr.mxu0 0.0
    %460 = vmatpush1.msra.mxu0 0.0
    %461 = vmatprep.subr.mxu0 0.0
    %462 = vmatpush1.msra.mxu0 0.0
    %463 = vmatprep.subr.mxu0 0.0
    %464 = vmatpush1.msra.mxu0 0.0
    %465 = vmatprep.subr.mxu0 0.0
    %466 = vmatpush1.msra.mxu0 0.0
    %467 = vmatprep.subr.mxu0 0.0
    %468 = vmatpush1.msra.mxu0 0.0
    %469 = vmatprep.subr.mxu0 0.0
    %470 = vmatpush1.msra.mxu0 0.0
    %471 = vmatprep.subr.mxu0 0.0
    %472 = vmatpush1.msra.mxu0 0.0
    %473 = vmatprep.subr.mxu0 0.0
    %474 = vmatpush1.msra.mxu0 0.0
    %475 = vmatprep.subr.mxu0 0.0
    %476 = vmatpush1.msra.mxu0 0.0
    %477 = vmatprep.subr.mxu0 0.0
    %478 = vmatpush1.msra.mxu0 0.0
    %479 = vmatprep.subr.mxu0 0.0
    %480 = vmatpush1.msra.mxu0 0.0
    %481 = vmatprep.subr.mxu0 0.0
    %482 = vmatpush1.msra.mxu0 0.0
    %483 = vmatprep.subr.mxu0 0.0
    %484 = vmatpush1.msra.mxu0 0.0
    %485 = vmatprep.subr.mxu0 0.0
    %486 = vmatpush1.msra.mxu0 0.0
    %487 = vmatprep.subr.mxu0 0.0
    %488 = vmatpush1.msra.mxu0 0.0
    %489 = vmatprep.subr.mxu0 0.0
    %490 = vmatpush1.msra.mxu0 0.0
    %491 = vmatprep.subr.mxu0 0.0
    %492 = vmatpush1.msra.mxu0 0.0
    %493 = vmatprep.subr.mxu0 0.0
    %494 = vmatpush1.msra.mxu0 0.0
    %495 = vmatprep.subr.mxu0 0.0
    %496 = vmatpush1.msra.mxu0 0.0
    %497 = vmatprep.subr.mxu0 0.0
    %498 = vmatpush1.msra.mxu0 0.0
    %499 = vmatprep.mubr.f32.mxu0 0.0
    %v500 = vand.u32 %v60, 4294901760
    %501 = vmatmul.mubr.f32.gmra.mrb[0].mxu0 %v500
    %v502 = vpop.f32.mrb[0].mxu0
    %v503 = vadd.f32 %v412, %v502
    %v504 = vpop.f32.mrb[0].mxu0
    %505 = vmatprep.mubr.f32.mxu0 0.0
    %v506 = vand.u32 %v63, 4294901760
    %507 = vmatmul.mubr.f32.gmra.mrb[0].mxu0 %v506
    %v508 = vpop.f32.mrb[0].mxu0
    %v509 = vadd.f32 %v420, %v508
    %v510 = vpop.f32.mrb[0].mxu0
    %511 = vdwg.mxu0
    %512 = vmatprep.subr.mxu0 0.0
    %v513 = vand.u32 %v54, 4294901760
    %514 = vmatpush1.msra.mxu0 %v513
    %515 = vmatprep.subr.mxu0 0.0
    %v516 = vand.u32 %v55, 4294901760
    %517 = vmatpush1.msra.mxu0 %v516
    %518 = vmatprep.subr.mxu0 0.0
    %v519 = vand.u32 %v56, 4294901760
    %520 = vmatpush1.msra.mxu0 %v519
    %521 = vmatprep.subr.mxu0 0.0
    %v522 = vand.u32 %v57, 4294901760
    %523 = vmatpush1.msra.mxu0 %v522
    %524 = vmatprep.subr.mxu0 0.0
    %525 = vmatpush1.msra.mxu0 0.0
    %526 = vmatprep.subr.mxu0 0.0
    %527 = vmatpush1.msra.mxu0 0.0
    %528 = vmatprep.subr.mxu0 0.0
    %529 = vmatpush1.msra.mxu0 0.0
    %530 = vmatprep.subr.mxu0 0.0
    %531 = vmatpush1.msra.mxu0 0.0
    %532 = vmatprep.subr.mxu0 0.0
    %533 = vmatpush1.msra.mxu0 0.0
    %534 = vmatprep.subr.mxu0 0.0
    %535 = vmatpush1.msra.mxu0 0.0
    %536 = vmatprep.subr.mxu0 0.0
    %537 = vmatpush1.msra.mxu0 0.0
    %538 = vmatprep.subr.mxu0 0.0
    %539 = vmatpush1.msra.mxu0 0.0
    %540 = vmatprep.subr.mxu0 0.0
    %541 = vmatpush1.msra.mxu0 0.0
    %542 = vmatprep.subr.mxu0 0.0
    %543 = vmatpush1.msra.mxu0 0.0
    %544 = vmatprep.subr.mxu0 0.0
    %545 = vmatpush1.msra.mxu0 0.0
    %546 = vmatprep.subr.mxu0 0.0
    %547 = vmatpush1.msra.mxu0 0.0
    %548 = vmatprep.subr.mxu0 0.0
    %549 = vmatpush1.msra.mxu0 0.0
    %550 = vmatprep.subr.mxu0 0.0
    %551 = vmatpush1.msra.mxu0 0.0
    %552 = vmatprep.subr.mxu0 0.0
    %553 = vmatpush1.msra.mxu0 0.0
    %554 = vmatprep.subr.mxu0 0.0
    %555 = vmatpush1.msra.mxu0 0.0
    %556 = vmatprep.subr.mxu0 0.0
    %557 = vmatpush1.msra.mxu0 0.0
    %558 = vmatprep.subr.mxu0 0.0
    %559 = vmatpush1.msra.mxu0 0.0
    %560 = vmatprep.subr.mxu0 0.0
    %561 = vmatpush1.msra.mxu0 0.0
    %562 = vmatprep.subr.mxu0 0.0
    %563 = vmatpush1.msra.mxu0 0.0
    %564 = vmatprep.subr.mxu0 0.0
    %565 = vmatpush1.msra.mxu0 0.0
    %566 = vmatprep.subr.mxu0 0.0
    %567 = vmatpush1.msra.mxu0 0.0
    %568 = vmatprep.subr.mxu0 0.0
    %569 = vmatpush1.msra.mxu0 0.0
    %570 = vmatprep.subr.mxu0 0.0
    %571 = vmatpush1.msra.mxu0 0.0
    %572 = vmatprep.subr.mxu0 0.0
    %573 = vmatpush1.msra.mxu0 0.0
    %574 = vmatprep.subr.mxu0 0.0
    %575 = vmatpush1.msra.mxu0 0.0
    %576 = vmatprep.subr.mxu0 0.0
    %577 = vmatpush1.msra.mxu0 0.0
    %578 = vmatprep.subr.mxu0 0.0
    %579 = vmatpush1.msra.mxu0 0.0
    %580 = vmatprep.mubr.f32.mxu0 0.0
    %v581 = vand.u32 %v60, 4294901760
    %582 = vmatmul.mubr.f32.gmra.mrb[0].mxu0 %v581
    %v583 = vpop.f32.mrb[0].mxu0
    %v584 = vadd.f32 %v503, %v583
    %v585 = vpop.f32.mrb[0].mxu0
    %586 = vmatprep.mubr.f32.mxu0 0.0
    %v587 = vand.u32 %v63, 4294901760
    %588 = vmatmul.mubr.f32.gmra.mrb[0].mxu0 %v587
    %v589 = vpop.f32.mrb[0].mxu0
    %v590 = vadd.f32 %v509, %v589
    %v591 = vpop.f32.mrb[0].mxu0
    %592 = vdwg.mxu0
    %v593 = vadd.f32 %v50, %v584
    %v594 = vadd.f32 %v51, %v590
    %595 = vst.msk [vmem:[#allocation2] sm:$0xff] %vm58, %v593
    %596 = vst.msk [vmem:[#allocation2 + $0x8] sm:$0xff] %vm58, %v594
    // Predicated region
    $region26: #{tpu_custom_call.1} parent=1 // pred_check
      %p597 = pneg %p43
    $region27: #{tpu_custom_call.1} parent=1 // pred_check_branch
      %599 = sbr.rel (%p597) target = $region29
    $region28: #{tpu_custom_call.1} parent=1 // pred_region
      %v600 = vld [vmem:[#allocation2] sm:$0xff]
      %v601 = vld [vmem:[#allocation2 + $0x8] sm:$0xff]
      %v602 = vld [vmem:[%s2] sm:$0x1]
      %v604 = vlaneseq
      %v605 = vshrl.u32 %v604, 7
      %v606 = vsub.s32 0, %v605
      %v607 = vrot.slane %v602, %v606
      %v609 = vadd.f32 %v600, %v607
      %v610 = vadd.f32 %v601, %v607
      %611 = vst.msk [vmem:[#allocation8] sm:$0xff] %vm58, %v609
      %612 = vst.msk [vmem:[#allocation8 + $0x8] sm:$0xff] %vm58, %v610
    $region29: #{tpu_custom_call.1} parent=1 // pred_fallthru
      _
    // Predicated region
    $region30: #{tpu_custom_call.1} parent=1 // pred_check
      _
    $region31: #{tpu_custom_call.1} parent=1 // pred_check_branch
      %614 = sbr.rel (0) target = $region33
    $region32: #{tpu_custom_call.1} parent=1 // pred_region
      %s616 = ssub.s32 256, 256
      %617 = vsyncadd [#allocation5], %s616
      %s618 = sshll.u32 [#allocation8], 4
      %s619 = int_to_ptr.vmem [resolvable:$true] %s618
      %624 = dma.vmem_to_hbm [thread:$0]  %s619, 256, %s3, [#allocation5], 128, 128, 8
    $region33: #{tpu_custom_call.1} parent=1 // pred_fallthru
      _
    // Predicated region
    $region34: #{tpu_custom_call.1} parent=1 // pred_check
      _
    $region35: #{tpu_custom_call.1} parent=1 // pred_check_branch
      %626 = sbr.rel (0) target = $region37
    $region36: #{tpu_custom_call.1} parent=1 // pred_region
      %627 = dma.done [#allocation5], 256
    $region37: #{tpu_custom_call.1} parent=1 // pred_fallthru
      _
    %628 = vsyncpa [#allocation4], 1
    %629 = vsyncpa [#allocation7], 1
    %630 = vsyncpa [#allocation5], 1

</llo_original>
